<compile_context>
chip_gen: v6e
topology: v6e:2x2x1
jax: 0.10.0
libtpu: 0.0.40
codegen_flags: <defaults>
</compile_context>

<pallas_src>
import jax
import jax.numpy as jnp
from jax.experimental import pallas as pl
from jax.experimental.pallas import tpu as pltpu

_MIB = 1024 * 1024


# ----------------------------------------------------------------------------
# Kernels
# ----------------------------------------------------------------------------
def _copy_kernel(x_ref, o_ref):
    # Tile already lands in the output's element order: straight copy.
    o_ref[...] = x_ref[...]


def _swap_minor_kernel(x_ref, o_ref):
    # x_ref: (b, th, tw) -> o_ref: (b, tw, th).  Batched transpose of the two
    # minor dims; Mosaic schedules per-vreg vxpose with bounded live ranges.
    o_ref[...] = jnp.swapaxes(x_ref[...], 1, 2)


# ----------------------------------------------------------------------------
# Sizing helpers
# ----------------------------------------------------------------------------
def _vmem_capacity_bytes():
    try:
        cap = int(pltpu.get_tpu_info().vmem_capacity_bytes)
        if cap > 0:
            return cap
    except Exception:
        pass
    return 64 * _MIB  # conservative (v7x-sized) fallback


def _default_block_bytes():
    # v7x has only 64 MiB VMEM per TensorCore -> smaller tiles; v5e/v6e: 128 MiB.
    return 4 * _MIB if _vmem_capacity_bytes() <= 64 * _MIB else 8 * _MIB


def _sublane(dtype):
    # Native sublane packing: 8 rows for 4-byte dtypes, 16 for bf16, 32 for i8/fp8.
    return max(8, 32 // max(1, jnp.dtype(dtype).itemsize))


def _compiler_params(grid_len, in_tile_bytes, out_tile_bytes):
    cap = _vmem_capacity_bytes()
    need = 2 * (in_tile_bytes + out_tile_bytes) + 4 * _MIB
    limit = int(min((3 * cap) // 4, max(32 * _MIB, need)))
    return pltpu.CompilerParams(
        dimension_semantics=("parallel",) * grid_len,
        vmem_limit_bytes=limit,
    )


def _cost(frames):
    nbytes = int(frames.size) * int(frames.dtype.itemsize)
    return pl.CostEstimate(flops=0, transcendentals=0, bytes_accessed=2 * nbytes)


# ----------------------------------------------------------------------------
# (1, 0, 2, 3): swap the leading C/T axes; (H, W) plane untouched.
# ----------------------------------------------------------------------------
def _permute_swap_ct(frames, block_bytes):
    C, T, H, W = frames.shape
    HW = H * W
    itm = int(frames.dtype.itemsize)
    sub = _sublane(frames.dtype)

    # Lane-dense path: collapse (H, W) -> H*W so the minor dim is wide.
    flat_ok = (HW % 128 == 0) and (sub * HW * itm <= block_bytes)
    if flat_ok:
        cap = block_bytes // (HW * itm)           # >= sub by flat_ok

        def rows(extent):
            return extent if extent <= cap else max(sub, (cap // sub) * sub)

        if C >= T:
            # Variant A: block C (output axis 1); iterate T one slice per step.
            # Flatten the *input* so the T index selects a column block of
            # width H*W (H*W % 128 == 0 keeps the minor block legal).
            b = rows(C)
            x2 = frames.reshape(C, T * HW)
            grid = (T, pl.cdiv(C, b))
            in_spec = pl.BlockSpec((b, HW), lambda t, j: (j, t))
            out_spec = pl.BlockSpec((None, b, HW), lambda t, j: (t, j, 0))
            tile = b * HW * itm
            out3 = pl.pallas_call(
                _copy_kernel,
                out_shape=jax.ShapeDtypeStruct((T, C, HW), frames.dtype),
                grid=grid,
                in_specs=[in_spec],
                out_specs=out_spec,
                compiler_params=_compiler_params(len(grid), tile, tile),
                cost_estimate=_cost(frames),
            )(x2)
            return out3.reshape(T, C, H, W)

        # Variant B: block T (output axis 0); iterate C one slice per step.
        # Flatten the *output* so the C index selects a column block.
        b = rows(T)
        x3 = frames.reshape(C, T, HW)
        grid = (C, pl.cdiv(T, b))
        in_spec = pl.BlockSpec((None, b, HW), lambda c, j: (c, j, 0))
        out_spec = pl.BlockSpec((b, HW), lambda c, j: (j, c))
        tile = b * HW * itm
        out2 = pl.pallas_call(
            _copy_kernel,
            out_shape=jax.ShapeDtypeStruct((T, C * HW), frames.dtype),
            grid=grid,
            in_specs=[in_spec],
            out_specs=out_spec,
            compiler_params=_compiler_params(len(grid), tile, tile),
            cost_estimate=_cost(frames),
        )(x3)
        return out2.reshape(T, C, H, W)

    # 4-D fallback: H*W not a 128 multiple (or a minimum lane-dense tile would
    # not fit).  Trailing block is (th, W) with dtype-aware sublane rounding;
    # the blocked leading dim is a major block dim, so it needs no rounding.
    rows_cap = block_bytes // max(1, W * itm)
    th = H if H <= max(rows_cap, sub) else max(sub, (rows_cap // sub) * sub)
    th = min(th, H)
    b_cap = max(1, block_bytes // max(1, th * W * itm))

    if C >= T:
        b = min(C, b_cap)
        grid = (T, pl.cdiv(C, b), pl.cdiv(H, th))
        in_spec = pl.BlockSpec((b, None, th, W), lambda t, j, h: (j, t, h, 0))
        out_spec = pl.BlockSpec((None, b, th, W), lambda t, j, h: (t, j, h, 0))
    else:
        b = min(T, b_cap)
        grid = (C, pl.cdiv(T, b), pl.cdiv(H, th))
        in_spec = pl.BlockSpec((None, b, th, W), lambda c, j, h: (c, j, h, 0))
        out_spec = pl.BlockSpec((b, None, th, W), lambda c, j, h: (j, c, h, 0))

    tile = b * th * W * itm
    return pl.pallas_call(
        _copy_kernel,
        out_shape=jax.ShapeDtypeStruct((T, C, H, W), frames.dtype),
        grid=grid,
        in_specs=[in_spec],
        out_specs=out_spec,
        compiler_params=_compiler_params(len(grid), tile, tile),
        cost_estimate=_cost(frames),
    )(frames)


# ----------------------------------------------------------------------------
# (p0, p1, 3, 2): trailing H/W transpose (with optional leading swap).
# ----------------------------------------------------------------------------
def _pick_spatial_tiles(H, W, itm, budget):
    # Each spatial tile dim appears once as a lane dim and once as a sublane
    # dim across the transpose, so it must be a multiple of 128 or the full
    # extent.  Prefer full-width rows so the strided input side reads whole
    # contiguous rows.
    if H * W * itm <= budget:
        return H, W

    def shrink(extent, max_rows):
        if extent <= max_rows or extent <= 128:
            return extent  # full extent is always legal
        return max(128, (max_rows // 128) * 128)

    th = shrink(H, budget // max(1, W * itm))
    if th * W * itm <= budget:
        return th, W
    tw = shrink(W, budget // max(1, th * itm))
    return th, tw


def _permute_swap_hw(frames, ordering, block_bytes):
    in_shape = frames.shape
    out_shape = tuple(in_shape[a] for a in ordering)
    H, W = in_shape[2], in_shape[3]
    itm = int(frames.dtype.itemsize)

    th, tw = _pick_spatial_tiles(H, W, itm, block_bytes)
    plane = th * tw * itm
    cap_lead = max(1, block_bytes // max(1, plane))

    # Block whichever leading output axis lets the tile grow larger; iterate
    # the other one slice at a time (prefer axis 1 on ties: contiguous output).
    blk_ax = 1 if min(out_shape[1], cap_lead) >= min(out_shape[0], cap_lead) else 0
    sq_ax = 1 - blk_ax
    b = min(out_shape[blk_ax], cap_lead)
    p_blk, p_sq = ordering[blk_ax], ordering[sq_ax]

    grid = (out_shape[sq_ax], pl.cdiv(out_shape[blk_ax], b),
            pl.cdiv(W, tw), pl.cdiv(H, th))

    out_block = [0, 0, tw, th]
    out_block[sq_ax] = None
    out_block[blk_ax] = b

    def out_imap(s, j, u, v):
        idx = [0, 0, u, v]
        idx[sq_ax] = s
        idx[blk_ax] = j
        return tuple(idx)

    in_block = [0, 0, th, tw]
    in_block[p_sq] = None
    in_block[p_blk] = b

    def in_imap(s, j, u, v):
        idx = [0, 0, v, u]
        idx[p_sq] = s
        idx[p_blk] = j
        return tuple(idx)

    tile = b * plane
    return pl.pallas_call(
        _swap_minor_kernel,
        out_shape=jax.ShapeDtypeStruct(out_shape, frames.dtype),
        grid=grid,
        in_specs=[pl.BlockSpec(tuple(in_block), in_imap)],
        out_specs=pl.BlockSpec(tuple(out_block), out_imap),
        compiler_params=_compiler_params(len(grid), tile, tile),
        cost_estimate=_cost(frames),
    )(frames)


# ----------------------------------------------------------------------------
# Public API
# ----------------------------------------------------------------------------
def permute(frames, ordering, *, block_bytes=None):
    """Pallas TPU implementation of frames.permute(ordering) for 4-D frames."""
    ordering = tuple(int(a) for a in ordering)
    if frames.ndim != 4 or sorted(ordering) != [0, 1, 2, 3]:
        raise ValueError(f"expected a 4-D permutation, got {ordering}")
    if ordering == (0, 1, 2, 3):
        # Identity permute is a view in PyTorch: zero-copy, zero HBM traffic.
        return frames
    if block_bytes is None:
        block_bytes = _default_block_bytes()
    if ordering == (1, 0, 2, 3):
        return _permute_swap_ct(frames, block_bytes)
    if ordering[2:] == (3, 2):
        return _permute_swap_hw(frames, ordering, block_bytes)
    # TODO(synk): orderings that move input axis 2 or 3 into a leading output
    # position (e.g. (2,3,0,1), (0,2,3,1)) need a different relayout strategy;
    # their BlockSpecs would violate the TPU (8,128) trailing-dim rule.
    raise NotImplementedError(f"ordering {ordering} is not supported by this kernel")


class Permute:
    """Drop-in analog of the PyTorch module."""

    def __init__(self, ordering):
        self.ordering = tuple(ordering)

    def __call__(self, frames):
        return permute(frames, self.ordering)


if __name__ == "__main__":
    key = jax.random.PRNGKey(0)
    k0, k1, k2, k3, k4 = jax.random.split(key, 5)

    C, T, H, W = 4, 8, 16, 16
    frames = jax.random.normal(k0, (C, T, H, W), dtype=jnp.float32)
    frames_bf16 = frames.astype(jnp.bfloat16)
    lead_a = jax.random.normal(k1, (40, 4, 16, 16), dtype=jnp.float32)
    lead_b = jax.random.normal(k2, (4, 40, 16, 16), dtype=jnp.float32)
    odd_lead = jax.random.normal(k3, (3, 5, 10, 12), dtype=jnp.float32)
    odd_hw = jax.random.normal(k4, (2, 3, 200, 176), dtype=jnp.float32)

    cases = [
        (frames, (0, 1, 2, 3), None),        # identity -> no-op
        (frames, (1, 0, 2, 3), None),        # lane-dense flat copy (block T)
        (lead_a, (1, 0, 2, 3), 16 * 1024),   # flat variant A, partial C blocks
        (lead_b, (1, 0, 2, 3), 16 * 1024),   # flat variant B, partial T blocks
        (frames_bf16, (1, 0, 2, 3), None),   # bf16 -> 16-row sublane packing
        (odd_lead, (1, 0, 2, 3), None),      # H*W not a 128 multiple -> 4-D fallback
        (frames, (0, 1, 3, 2), None),        # H/W swap -> batched in-kernel transpose
        (frames, (1, 0, 3, 2), None),        # C/T and H/W swap
        (odd_hw, (0, 1, 3, 2), 64 * 1024),   # 128-tiles with masked partial edges
        (odd_hw, (1, 0, 3, 2), 64 * 1024),
    ]
    for x, ordering, bb in cases:
        kwargs = {} if bb is None else dict(block_bytes=bb)
        out = jax.block_until_ready(permute(x, ordering, **kwargs))
        ref = jnp.transpose(x, ordering)
        assert out.shape == ref.shape, (ordering, out.shape, ref.shape)
        assert out.dtype == ref.dtype, (ordering, out.dtype, ref.dtype)
        assert bool(jnp.array_equal(out, ref)), f"mismatch for {ordering}, bb={bb}"

    print("KERNEL_OK")
</pallas_src>

<mosaic_0001>
module attributes {stable_mosaic.version = 11 : i64} {
  func.func @_copy_kernel(%arg0: i32, %arg1: i32, %arg2: memref<1x8x256xf32, #tpu.memory_space<vmem>>, %arg3: memref<8x256xf32, #tpu.memory_space<vmem>>) attributes {dimension_semantics = [#tpu.dimension_semantics<parallel>, #tpu.dimension_semantics<parallel>], iteration_bounds = array<i64: 4, 1>, scalar_prefetch = 0 : i64, scratch_operands = 0 : i64, tpu.core_type = #tpu.core_type<tc>, window_params = [{transform_indices = @transform_0, window_bounds = array<i64: 1, 8, 256>}, {transform_indices = @transform_1, window_bounds = array<i64: 8, 256>}]} {
    %c0 = arith.constant 0 : index
    %c0_0 = arith.constant 0 : index
    %c0_1 = arith.constant 0 : index
    %0 = vector.load %arg2[%c0, %c0_0, %c0_1] : memref<1x8x256xf32, #tpu.memory_space<vmem>>, vector<1x8x256xf32>
    %1 = vector.shape_cast %0 : vector<1x8x256xf32> to vector<8x256xf32>
    %c0_2 = arith.constant 0 : index
    %c0_3 = arith.constant 0 : index
    %2 = vector.load %arg3[%c0_2, %c0_3] : memref<8x256xf32, #tpu.memory_space<vmem>>, vector<8x256xf32>
    tpu.vector_store %arg3[%c0_2, %c0_3], %1 {strides = array<i32>} : memref<8x256xf32, #tpu.memory_space<vmem>>, vector<8x256xf32>,
    return
  }
  func.func @transform_0(%arg0: i32, %arg1: i32) -> (i32, i32, i32) {
    %c0_i32 = arith.constant 0 : i32
    %c0_i32_0 = arith.constant 0 : i32
    return %arg0, %arg1, %c0_i32 : i32, i32, i32
  }
  func.func @transform_1(%arg0: i32, %arg1: i32) -> (i32, i32) {
    %c0_i32 = arith.constant 0 : i32
    return %arg1, %arg0 : i32, i32
  }
}

</mosaic_0001>

<llo_original>
// kernel: tpu_custom_call.1
$region0: #{tpu_custom_call.1}
  #allocation0 [shape = 'u32[]', space=smem, size = 0x4, offset = 0x4, fixed_abs, tag = 'smem constant byte address 0x4 - core index']
  #allocation1 [shape = 'u32[144,128]{1,0:T(1,128)}', space=vmem, size = 0x12000, scoped, tag = 'internal scratch']
  %s0 = inlined_call_operand.hbm [shape: f32[4,8,256], index: 0, kind: input, shape index: {}]
  %s1 = inlined_call_operand.hbm [shape: f32[8,1024], index: 1, kind: output, shape index: {}]
  %s2 = sld [smem:[#allocation0]]
  $region41: #{tpu_custom_call.1} parent=0
    _
  %s4 = ssub.s32 1, %s2
  %s5 = scalar_select 0, %s4, %s2
  $region1: #{tpu_custom_call.1} parent=0
    #allocation2 [shape = 'u8[16384]{0}', space=vmem, size = 0x4000, scoped, tag = 'input window, operand 0']
    #allocation3 [shape = 's32[2]{0}', space=sflag, size = 0x8, scoped, tag = 'scoped memory for tpu_custom_call.1']
    #allocation4 [shape = 's32[2]{0}', space=sflag, size = 0x8, scoped, tag = 'scoped memory for tpu_custom_call.1']
    #allocation5 [shape = 'u8[16384]{0}', space=vmem, size = 0x4000, scoped, tag = 'output window, operand 0']
    %6 = vsyncpa [#allocation3], 0
    %s7 = scalar_lea.sflag [#allocation3], 1
    %8 = vsyncpa %s7, 0
    %9 = vsyncpa [#allocation4], 0
    %s10 = scalar_lea.sflag [#allocation4], 1
    %11 = vsyncpa %s10, 0
    loop: start=0, step=1, limit=6
    $region2: #{tpu_custom_call.1} parent=1 // loop_pre_header
      _
    $region3: #{tpu_custom_call.1} parent=1 // loop_header
      %s13 = sphi 0, %s17
      %p14 = scmp.ge.s32.totalorder %s13, 6
      %s20 = sphi 0, %s32
      %s21 = sphi 0, %s28
      %s22 = sphi 0, %s20
      %s23 = sphi 0, %s21
      %s24 = sphi 0, %s22
      %s25 = sphi 0, %s23
      %s37 = sphi 0, %s39
      %s40 = sphi 0, %s37
      %s41 = sphi 0, %s40
      %s57 = sphi 0, %s41
      %s65 = sphi 0, %s67
      %s68 = sphi 0, %s65
      %s69 = sphi 0, %s68
      %s85 = sphi 0, %s69
    $region4: #{tpu_custom_call.1} parent=1 // loop_header_branch
      %16 = sbr.rel (%p14) target = $region8
    $region5: #{tpu_custom_call.1} parent=1 // loop_body
      %s18 = ssub.s32 %s13, 1
      %s19 = ssub.s32 %s13, 2
      %s26 = sadd.s32 1, %s21
      %p27 = scmp.ge.s32.totalorder %s26, 1
      %s28 = scalar_select %p27, 0, %s26
      %s29 = sadd.s32 1, %s20
      %s30 = scalar_select %p27, %s29, %s20
      %p31 = scmp.ge.s32.totalorder %s30, 4
      %s32 = scalar_select %p31, 0, %s30
      %s33 = ssub.s32 %s20, %s32
      %s34 = ssub.s32 %s21, %s28
      %s35 = sor.u32 %s33, %s34
      %p36 = scmp.eq.s32.totalorder %s35, 0
      %s38 = sadd.s32 %s37, 1
      %s39 = scalar_select %p36, %s37, %s38
      %p42 = pneg %p36
      %p43 = scmp.eq.s32.totalorder %s13, 3
      %p44 = por %p42, %p43
      %p45 = scmp.ne.s32.totalorder %s37, %s40
      %p46 = scmp.eq.s32.totalorder %s13, 0
      %p47 = por %p45, %p46
      %p48 = scmp.ne.s32.totalorder %s37, %s40
      %p49 = scmp.eq.s32.totalorder %s18, 3
      %p50 = por %p48, %p49
      %p51 = scmp.ne.s32.totalorder %s40, %s41
      %p52 = scmp.eq.s32.totalorder %s18, 0
      %p53 = por %p51, %p52
      %p54 = scmp.ne.s32.totalorder %s40, %s41
      %p55 = scmp.eq.s32.totalorder %s19, 3
      %p56 = por %p54, %p55
      %p58 = scmp.ne.s32.totalorder %s41, %s57
      %p59 = scmp.eq.s32.totalorder %s19, 0
      %p60 = por %p58, %p59
      %s61 = ssub.s32 %s21, %s28
      %s62 = ssub.s32 %s20, %s32
      %s63 = sor.u32 %s61, %s62
      %p64 = scmp.eq.s32.totalorder %s63, 0
      %s66 = sadd.s32 %s65, 1
      %s67 = scalar_select %p64, %s65, %s66
      %p70 = pneg %p64
      %p71 = scmp.eq.s32.totalorder %s13, 3
      %p72 = por %p70, %p71
      %p73 = scmp.ne.s32.totalorder %s65, %s68
      %p74 = scmp.eq.s32.totalorder %s13, 0
      %p75 = por %p73, %p74
      %p76 = scmp.ne.s32.totalorder %s65, %s68
      %p77 = scmp.eq.s32.totalorder %s18, 3
      %p78 = por %p76, %p77
      %p79 = scmp.ne.s32.totalorder %s68, %s69
      %p80 = scmp.eq.s32.totalorder %s18, 0
      %p81 = por %p79, %p80
      %p82 = scmp.ne.s32.totalorder %s68, %s69
      %p83 = scmp.eq.s32.totalorder %s19, 3
      %p84 = por %p82, %p83
      %p86 = scmp.ne.s32.totalorder %s69, %s85
      %p87 = scmp.eq.s32.totalorder %s19, 0
      %p88 = por %p86, %p87
      %p89 = scmp.le.s32.totalorder 1, %s13
      %p90 = scmp.lt.s32.totalorder %s13, 5
      %p91 = pnand %p89, %p90
      %p92 = pneg %p91
      // Predicated region
      $region9: #{tpu_custom_call.1} parent=5 // pred_check
        _
      $region10: #{tpu_custom_call.1} parent=5 // pred_check_branch
        %94 = sbr.rel (%p91) target = $region12
      $region11: #{tpu_custom_call.1} parent=5 // pred_region
        %s95 = ssub.s32 %s13, 1
      $region12: #{tpu_custom_call.1} parent=5 // pred_fallthru
        _
      %p96 = scmp.lt.s32.totalorder %s13, 4
      // Predicated region
      $region13: #{tpu_custom_call.1} parent=5 // pred_check
        %p97 = pneg %p96
      $region14: #{tpu_custom_call.1} parent=5 // pred_check_branch
        %99 = sbr.rel (%p97) target = $region16
      $region15: #{tpu_custom_call.1} parent=5 // pred_region
        // Predicated region
        $region17: #{tpu_custom_call.1} parent=15 // pred_check
          %p100 = pneg %p47
        $region18: #{tpu_custom_call.1} parent=15 // pred_check_branch
          %102 = sbr.rel (%p100) target = $region20
        $region19: #{tpu_custom_call.1} parent=15 // pred_region
          %s103 = sand.u32 %s37, 1
          %s104 = scalar_lea.sflag [#allocation3], %s103
          %s105 = sand.u32 %s37, 1
          %s106 = smul.addr %s105, 16
          %s107 = scalar_lea.vmem [#allocation2], %s106
          %s109 = ssub.s32 256, 256
          %110 = vsyncadd %s104, %s109
          %s111 = smul.addr %s21, 2
          %s112 = smul.addr %s20, 2
          %s113 = sadd.s32 %s111, %s112
          %s114 = smul.addr %s113, 128
          %s115 = scalar_lea.hbm %s0, %s114
          %s117 = sshll.u32 %s107, 4
          %s118 = int_to_ptr.vmem [resolvable:$true] %s117
          %120 = dma.hbm_to_vmem [thread:$0]  %s115, 256, %s118, %s104
        $region20: #{tpu_custom_call.1} parent=15 // pred_fallthru
          _
      $region16: #{tpu_custom_call.1} parent=5 // pred_fallthru
        _
      %p121 = scmp.le.s32.totalorder 1, %s13
      %p122 = scmp.lt.s32.totalorder %s13, 5
      %p123 = pnand %p121, %p122
      %p124 = pneg %p123
      // Predicated region
      $region21: #{tpu_custom_call.1} parent=5 // pred_check
        _
      $region22: #{tpu_custom_call.1} parent=5 // pred_check_branch
        %126 = sbr.rel (%p123) target = $region24
      $region23: #{tpu_custom_call.1} parent=5 // pred_region
        %s127 = ssub.s32 %s13, 1
        %s128 = sand.u32 %s40, 1
        %s129 = scalar_lea.sflag [#allocation3], %s128
        %s130 = sand.u32 %s40, 1
        %s131 = smul.addr %s130, 16
        %s132 = scalar_lea.vmem [#allocation2], %s131
        // Predicated region
        $region25: #{tpu_custom_call.1} parent=23 // pred_check
          %p133 = pneg %p53
        $region26: #{tpu_custom_call.1} parent=23 // pred_check_branch
          %135 = sbr.rel (%p133) target = $region28
        $region27: #{tpu_custom_call.1} parent=23 // pred_region
          %136 = dma.done %s129, 256
        $region28: #{tpu_custom_call.1} parent=23 // pred_fallthru
          _
        %s137 = sand.u32 %s40, 1
        %s138 = scalar_lea.sflag [#allocation3], %s137
        %s139 = sand.u32 %s40, 1
        %s140 = smul.addr %s139, 16
        %s141 = scalar_lea.vmem [#allocation2], %s140
        %p142 = pneg %p53
        %p143 = pneg %p50
        %p144 = pneg %p81
        %p145 = pneg %p78
        %s146 = sand.u32 %s68, 1
        %s147 = scalar_lea.sflag [#allocation4], %s146
        %s148 = sand.u32 %s68, 1
        %s149 = smul.addr %s148, 16
        %s150 = scalar_lea.vmem [#allocation5], %s149
        %s151 = smul.u32 2, %s22
        %v152 = vld [vmem:[%s132] sm:$0xff]
        %v153 = vld [vmem:[%s132 + $0x8] sm:$0xff]
        %154 = vst [vmem:[%s150] sm:$0xff] %v152
        %155 = vst [vmem:[%s150 + $0x8] sm:$0xff] %v153
        %s156 = sand.u32 %s68, 1
        %s157 = scalar_lea.sflag [#allocation4], %s156
        %s158 = sand.u32 %s68, 1
        %s159 = smul.addr %s158, 16
        %s160 = scalar_lea.vmem [#allocation5], %s159
        // Predicated region
        $region29: #{tpu_custom_call.1} parent=23 // pred_check
          %p161 = pneg %p78
        $region30: #{tpu_custom_call.1} parent=23 // pred_check_branch
          %163 = sbr.rel (%p161) target = $region32
        $region31: #{tpu_custom_call.1} parent=23 // pred_region
          %s164 = smul.u32 2, %s22
          %s166 = ssub.s32 256, 256
          %167 = vsyncadd %s157, %s166
          %s168 = smul.addr %s23, 8
          %s169 = sadd.s32 %s164, %s168
          %s170 = smul.addr %s169, 128
          %s171 = scalar_lea.hbm %s1, %s170
          %s173 = sshll.u32 %s160, 4
          %s174 = int_to_ptr.vmem [resolvable:$true] %s173
          %176 = dma.vmem_to_hbm [thread:$0]  %s174, 256, %s171, %s157
        $region32: #{tpu_custom_call.1} parent=23 // pred_fallthru
          _
      $region24: #{tpu_custom_call.1} parent=5 // pred_fallthru
        _
      %p177 = scmp.le.s32.totalorder 2, %s13
      // Predicated region
      $region33: #{tpu_custom_call.1} parent=5 // pred_check
        %p178 = pneg %p177
      $region34: #{tpu_custom_call.1} parent=5 // pred_check_branch
        %180 = sbr.rel (%p178) target = $region36
      $region35: #{tpu_custom_call.1} parent=5 // pred_region
        %s181 = ssub.s32 %s13, 2
        // Predicated region
        $region37: #{tpu_custom_call.1} parent=35 // pred_check
          %p182 = pneg %p84
        $region38: #{tpu_custom_call.1} parent=35 // pred_check_branch
          %184 = sbr.rel (%p182) target = $region40
        $region39: #{tpu_custom_call.1} parent=35 // pred_region
          %s185 = sand.u32 %s69, 1
          %s186 = scalar_lea.sflag [#allocation4], %s185
          %s187 = sand.u32 %s69, 1
          %s188 = smul.addr %s187, 16
          %s189 = scalar_lea.vmem [#allocation5], %s188
          %190 = dma.done %s186, 256
        $region40: #{tpu_custom_call.1} parent=35 // pred_fallthru
          _
      $region36: #{tpu_custom_call.1} parent=5 // pred_fallthru
        _
    $region6: #{tpu_custom_call.1} parent=1 // loop_footer
      %s17 = sadd.s32 1, %s13
    $region7: #{tpu_custom_call.1} parent=1 // loop_footer_branch
      %12 = sbr.rel target = $region3
    $region8: #{tpu_custom_call.1} parent=1 // loop_exit
      _
    %191 = vsyncpa [#allocation3], 1
    %s192 = scalar_lea.sflag [#allocation3], 1
    %193 = vsyncpa %s192, 1
    %194 = vsyncpa [#allocation4], 1
    %s195 = scalar_lea.sflag [#allocation4], 1
    %196 = vsyncpa %s195, 1

</llo_original>
